<compile_context>
chip_gen: v6e
topology: v6e:2x2x1
jax: 0.10.0
libtpu: 0.0.40
codegen_flags: <defaults>
</compile_context>

<pallas_src>
import jax
import jax.numpy as jnp
from jax import lax
from jax.experimental import pallas as pl
from jax.experimental.pallas import tpu as pltpu

_LANE_W = 1024            # lane-dense output width (multiple of 128)
_HALF = _LANE_W // 2      # each Box-Muller pair fills two output lanes
_TWO_PI = 6.283185307179586


def _mix32(x):
    """lowbias32 integer hash (strong avalanche), uint32 -> uint32."""
    x = x ^ (x >> 16)
    x = x * jnp.uint32(0x7FEB352D)
    x = x ^ (x >> 15)
    x = x * jnp.uint32(0x846CA68B)
    x = x ^ (x >> 16)
    return x


def _gen_noise_kernel(seed_ref, o_ref):
    """Fill one (tm, 1024) output block with N(0,1) noise (paired Box-Muller)."""
    tm = o_ref.shape[0]

    # ---- counter-based PRNG: unique counter per output pair, per tile -------
    row = lax.broadcasted_iota(jnp.int32, (tm, _HALF), 0)
    col = lax.broadcasted_iota(jnp.int32, (tm, _HALF), 1)
    g_row = pl.program_id(0) * tm + row                 # global row index
    ctr = (g_row * _HALF + col).astype(jnp.uint32)      # global pair index
    ctr2 = ctr + ctr                                    # even/odd -> 2 streams

    key = (seed_ref[0].astype(jnp.uint32) + jnp.uint32(1)) * jnp.uint32(0x9E3779B9)
    bits1 = _mix32(ctr2 ^ key)
    bits2 = _mix32((ctr2 + jnp.uint32(1)) ^ key)

    # top 24 bits -> uniforms strictly inside (0, 1); +0.5 keeps u1 > 0 (log ok)
    m1 = (bits1 >> 8).astype(jnp.int32).astype(jnp.float32) + 0.5
    m2 = (bits2 >> 8).astype(jnp.int32).astype(jnp.float32) + 0.5
    u1 = m1 * jnp.float32(1.0 / (1 << 24))
    theta = m2 * jnp.float32(_TWO_PI / (1 << 24))       # 2*pi folded into scale

    # ---- paired Box-Muller: one (u1, theta) -> two independent N(0,1) -------
    r = jnp.sqrt(jnp.float32(-2.0) * jnp.log(u1))
    z0 = r * jnp.cos(theta)
    z1 = r * jnp.sin(theta)

    o_ref[:, :_HALF] = z0.astype(o_ref.dtype)
    o_ref[:, _HALF:] = z1.astype(o_ref.dtype)


def gen_noise(x, dim2, seed=0):
    """Pallas equivalent of GenNoise(dim2)(x).

    Args:
      x:    jnp array of shape (N, C, H, W); only shape/dtype are used.
      dim2: number of output noise channels.
      seed: int seed (deterministic replacement for torch's normal_()).

    Returns:
      jnp array of shape (N, dim2, H, W), dtype of x, filled with N(0,1) noise.
    """
    n, _, h, w = x.shape
    total = n * dim2 * h * w

    rows = -(-total // _LANE_W)                  # ceil: lane-dense rows needed
    tm = 512 if rows >= 512 else rows            # (tm, 1024) f32 block <= 2 MiB
    grid_n = -(-rows // tm)
    rows_pad = grid_n * tm

    seed_arr = jnp.array([seed], dtype=jnp.int32)
    itemsize = jnp.dtype(x.dtype).itemsize

    out = pl.pallas_call(
        _gen_noise_kernel,
        out_shape=jax.ShapeDtypeStruct((rows_pad, _LANE_W), x.dtype),
        grid=(grid_n,),
        in_specs=[pl.BlockSpec(memory_space=pltpu.MemorySpace.SMEM)],
        out_specs=pl.BlockSpec((tm, _LANE_W), lambda i: (i, 0)),
        compiler_params=pltpu.CompilerParams(
            dimension_semantics=("parallel",)),      # megacore sharding on v7x
        cost_estimate=pl.CostEstimate(
            flops=12 * rows_pad * _LANE_W,
            transcendentals=2 * rows_pad * _LANE_W,
            bytes_accessed=rows_pad * _LANE_W * itemsize),
    )(seed_arr)

    # Glue: flatten, drop padding, reshape back to NCHW.
    return out.reshape(-1)[:total].reshape(n, dim2, h, w)


if __name__ == "__main__":
    key = jax.random.PRNGKey(0)

    # Small NCHW input consistent with the module's usage.
    N, C, H, W = 2, 4, 16, 16
    dim2 = 8
    x = jax.random.normal(key, (N, C, H, W), dtype=jnp.float32)

    noise = jax.block_until_ready(gen_noise(x, dim2, seed=0))

    # Shape/dtype contract of GenNoise, and roughly N(0,1) statistics.
    assert noise.shape == (N, dim2, H, W), noise.shape
    assert noise.dtype == x.dtype, noise.dtype
    assert bool(jnp.all(jnp.isfinite(noise)))
    mean = float(jnp.mean(noise))
    std = float(jnp.std(noise))
    assert abs(mean) < 0.2, mean
    assert abs(std - 1.0) < 0.2, std

    # Different seeds must give different noise.
    noise2 = jax.block_until_ready(gen_noise(x, dim2, seed=1))
    assert float(jnp.max(jnp.abs(noise - noise2))) > 1e-3

    print("KERNEL_OK")
</pallas_src>

<mosaic_0001>
module attributes {stable_mosaic.version = 11 : i64} {
  func.func @_gen_noise_kernel(%arg0: i32, %arg1: memref<1xi32, #tpu.memory_space<smem>>, %arg2: memref<4x1024xf32, #tpu.memory_space<vmem>>) attributes {dimension_semantics = [#tpu.dimension_semantics<parallel>], iteration_bounds = array<i64: 1>, scalar_prefetch = 0 : i64, scratch_operands = 0 : i64, tpu.core_type = #tpu.core_type<tc>, window_params = [{transform_indices = @transform_0, window_bounds = array<i64: 1>}, {transform_indices = @transform_1, window_bounds = array<i64: 4, 1024>}]} {
    %0 = tpu.iota {dimensions = array<i32: 0>} : vector<4x512xi32>
    %1 = tpu.iota {dimensions = array<i32: 1>} : vector<4x512xi32>
    %c4_i32 = arith.constant 4 : i32
    %2 = arith.muli %arg0, %c4_i32 : i32
    %3 = vector.broadcast %2 : i32 to vector<4x512xi32>
    %4 = arith.addi %3, %0 : vector<4x512xi32>
    %c512_i32 = arith.constant 512 : i32
    %5 = vector.broadcast %c512_i32 : i32 to vector<4x512xi32>
    %6 = arith.muli %4, %5 : vector<4x512xi32>
    %7 = arith.addi %6, %1 : vector<4x512xi32>
    %8 = arith.addi %7, %7 : vector<4x512xi32>
    %c0 = arith.constant 0 : index
    %9 = memref.load %arg1[%c0] : memref<1xi32, #tpu.memory_space<smem>>
    %c1_i32 = arith.constant 1 : i32
    %10 = arith.addi %9, %c1_i32 : i32
    %c-1640531527_i32 = arith.constant -1640531527 : i32
    %11 = arith.muli %10, %c-1640531527_i32 : i32
    %12 = vector.broadcast %11 : i32 to vector<4x512xi32>
    %13 = arith.xori %8, %12 : vector<4x512xi32>
    %c16_i32 = arith.constant 16 : i32
    %14 = vector.broadcast %c16_i32 : i32 to vector<4x512xi32>
    %15 = arith.shrui %13, %14 : vector<4x512xi32>
    %16 = arith.xori %13, %15 : vector<4x512xi32>
    %c2146121005_i32 = arith.constant 2146121005 : i32
    %17 = vector.broadcast %c2146121005_i32 : i32 to vector<4x512xi32>
    %18 = arith.muli %16, %17 : vector<4x512xi32>
    %c15_i32 = arith.constant 15 : i32
    %19 = vector.broadcast %c15_i32 : i32 to vector<4x512xi32>
    %20 = arith.shrui %18, %19 : vector<4x512xi32>
    %21 = arith.xori %18, %20 : vector<4x512xi32>
    %c-2073254261_i32 = arith.constant -2073254261 : i32
    %22 = vector.broadcast %c-2073254261_i32 : i32 to vector<4x512xi32>
    %23 = arith.muli %21, %22 : vector<4x512xi32>
    %c16_i32_0 = arith.constant 16 : i32
    %24 = vector.broadcast %c16_i32_0 : i32 to vector<4x512xi32>
    %25 = arith.shrui %23, %24 : vector<4x512xi32>
    %26 = arith.xori %23, %25 : vector<4x512xi32>
    %c1_i32_1 = arith.constant 1 : i32
    %27 = vector.broadcast %c1_i32_1 : i32 to vector<4x512xi32>
    %28 = arith.addi %8, %27 : vector<4x512xi32>
    %29 = vector.broadcast %11 : i32 to vector<4x512xi32>
    %30 = arith.xori %28, %29 : vector<4x512xi32>
    %c16_i32_2 = arith.constant 16 : i32
    %31 = vector.broadcast %c16_i32_2 : i32 to vector<4x512xi32>
    %32 = arith.shrui %30, %31 : vector<4x512xi32>
    %33 = arith.xori %30, %32 : vector<4x512xi32>
    %c2146121005_i32_3 = arith.constant 2146121005 : i32
    %34 = vector.broadcast %c2146121005_i32_3 : i32 to vector<4x512xi32>
    %35 = arith.muli %33, %34 : vector<4x512xi32>
    %c15_i32_4 = arith.constant 15 : i32
    %36 = vector.broadcast %c15_i32_4 : i32 to vector<4x512xi32>
    %37 = arith.shrui %35, %36 : vector<4x512xi32>
    %38 = arith.xori %35, %37 : vector<4x512xi32>
    %c-2073254261_i32_5 = arith.constant -2073254261 : i32
    %39 = vector.broadcast %c-2073254261_i32_5 : i32 to vector<4x512xi32>
    %40 = arith.muli %38, %39 : vector<4x512xi32>
    %c16_i32_6 = arith.constant 16 : i32
    %41 = vector.broadcast %c16_i32_6 : i32 to vector<4x512xi32>
    %42 = arith.shrui %40, %41 : vector<4x512xi32>
    %43 = arith.xori %40, %42 : vector<4x512xi32>
    %c8_i32 = arith.constant 8 : i32
    %44 = vector.broadcast %c8_i32 : i32 to vector<4x512xi32>
    %45 = arith.shrui %26, %44 : vector<4x512xi32>
    %46 = arith.sitofp %45 : vector<4x512xi32> to vector<4x512xf32>
    %cst = arith.constant 5.000000e-01 : f32
    %47 = vector.broadcast %cst : f32 to vector<4x512xf32>
    %48 = arith.addf %46, %47 : vector<4x512xf32>
    %c8_i32_7 = arith.constant 8 : i32
    %49 = vector.broadcast %c8_i32_7 : i32 to vector<4x512xi32>
    %50 = arith.shrui %43, %49 : vector<4x512xi32>
    %51 = arith.sitofp %50 : vector<4x512xi32> to vector<4x512xf32>
    %cst_8 = arith.constant 5.000000e-01 : f32
    %52 = vector.broadcast %cst_8 : f32 to vector<4x512xf32>
    %53 = arith.addf %51, %52 : vector<4x512xf32>
    %cst_9 = arith.constant 5.96046448E-8 : f32
    %54 = vector.broadcast %cst_9 : f32 to vector<4x512xf32>
    %55 = arith.mulf %48, %54 : vector<4x512xf32>
    %cst_10 = arith.constant 3.74507039E-7 : f32
    %56 = vector.broadcast %cst_10 : f32 to vector<4x512xf32>
    %57 = arith.mulf %53, %56 : vector<4x512xf32>
    %58 = math.log %55 : vector<4x512xf32>
    %cst_11 = arith.constant -2.000000e+00 : f32
    %59 = vector.broadcast %cst_11 : f32 to vector<4x512xf32>
    %60 = arith.mulf %59, %58 : vector<4x512xf32>
    %61 = math.sqrt %60 : vector<4x512xf32>
    %62 = math.cos %57 : vector<4x512xf32>
    %63 = arith.mulf %61, %62 : vector<4x512xf32>
    %64 = math.sin %57 : vector<4x512xf32>
    %65 = arith.mulf %61, %64 : vector<4x512xf32>
    %c0_12 = arith.constant 0 : index
    %c0_13 = arith.constant 0 : index
    %66 = vector.load %arg2[%c0_12, %c0_13] : memref<4x1024xf32, #tpu.memory_space<vmem>>, vector<4x512xf32>
    tpu.vector_store %arg2[%c0_12, %c0_13], %63 {strides = array<i32>} : memref<4x1024xf32, #tpu.memory_space<vmem>>, vector<4x512xf32>,
    %c0_14 = arith.constant 0 : index
    %c512 = arith.constant 512 : index
    %67 = vector.load %arg2[%c0_14, %c512] : memref<4x1024xf32, #tpu.memory_space<vmem>>, vector<4x512xf32>
    tpu.vector_store %arg2[%c0_14, %c512], %65 {strides = array<i32>} : memref<4x1024xf32, #tpu.memory_space<vmem>>, vector<4x512xf32>,
    return
  }
  func.func @transform_0(%arg0: i32) -> i32 {
    %c0_i32 = arith.constant 0 : i32
    %c0_i32_0 = arith.constant 0 : i32
    return %c0_i32 : i32
  }
  func.func @transform_1(%arg0: i32) -> (i32, i32) {
    %c0_i32 = arith.constant 0 : i32
    %c0_i32_0 = arith.constant 0 : i32
    return %arg0, %c0_i32 : i32, i32
  }
}

</mosaic_0001>

<llo_original>
// kernel: tpu_custom_call.1
$region0: #{tpu_custom_call.1}
  #allocation0 [shape = 'u32[]', space=smem, size = 0x4, offset = 0x4, fixed_abs, tag = 'smem constant byte address 0x4 - core index']
  #allocation1 [shape = 'u32[144,128]{1,0:T(1,128)}', space=vmem, size = 0x12000, scoped, tag = 'internal scratch']
  #allocation2 [shape = 's32[1]{0:T(128)S(6)}', space=smem, size = 0x200, scoped, tag = 'scoped memory for tpu_custom_call.1']
  %s0 = inlined_call_operand.<no memory space> [shape: s32[1], index: 0, kind: input, shape index: {}]
  %s1 = inlined_call_operand.hbm [shape: f32[4,1024], index: 1, kind: output, shape index: {}]
  %s2 = sld [smem:[#allocation0]]
  $region14: #{tpu_custom_call.1} parent=0
    _
  %s4 = ssub.s32 1, %s2
  %s5 = scalar_select 0, %s4, %s2
  %6 = sst [smem:[#allocation2]] %s0
  $region1: #{tpu_custom_call.1} parent=0
    #allocation3 [shape = 'u8[16384]{0}', space=vmem, size = 0x4000, scoped, tag = 'output window, operand 0, single buffered']
    #allocation4 [shape = 's32[1]{0}', space=sflag, size = 0x4, scoped, tag = 'scoped memory for tpu_custom_call.1']
    %7 = vsyncpa [#allocation4], 0
    // Predicated region
    $region2: #{tpu_custom_call.1} parent=1 // pred_check
      _
    $region3: #{tpu_custom_call.1} parent=1 // pred_check_branch
      %9 = sbr.rel (0) target = $region5
    $region4: #{tpu_custom_call.1} parent=1 // pred_region
      _
    $region5: #{tpu_custom_call.1} parent=1 // pred_fallthru
      _
    %v10 = vlaneseq
    %v11 = vshrl.u32 %v10, 7
    %v12 = vlaneseq
    %v13 = vand.u32 %v12, 127
    %v14 = vadd.s32 %v13, 128
    %v15 = vadd.s32 %v13, 256
    %v16 = vadd.s32 %v13, 384
    %s17 = smul.u32 0, 4
    %v18 = vstv %s17
    %v19 = vadd.s32 %v18, %v11
    %v20 = vmul.u32 %v19, 512
    %v21 = vadd.s32 %v20, %v13
    %v22 = vadd.s32 %v20, %v14
    %v23 = vadd.s32 %v20, %v15
    %v24 = vadd.s32 %v20, %v16
    %v25 = vadd.s32 %v21, %v21
    %v26 = vadd.s32 %v22, %v22
    %v27 = vadd.s32 %v23, %v23
    %v28 = vadd.s32 %v24, %v24
    %s29 = sld [smem:[#allocation2]]
    %s30 = sadd.s32 %s29, 1
    %s31 = smul.u32 %s30, 2654435769
    %v32 = vstv %s31
    %v33 = vxor.u32 %v25, %v32
    %v34 = vxor.u32 %v26, %v32
    %v35 = vxor.u32 %v27, %v32
    %v36 = vxor.u32 %v28, %v32
    %v37 = vshrl.u32 %v33, 16
    %v38 = vshrl.u32 %v34, 16
    %v39 = vshrl.u32 %v35, 16
    %v40 = vshrl.u32 %v36, 16
    %v41 = vxor.u32 %v33, %v37
    %v42 = vxor.u32 %v34, %v38
    %v43 = vxor.u32 %v35, %v39
    %v44 = vxor.u32 %v36, %v40
    %v45 = vmul.u32 %v41, 2146121005
    %v46 = vmul.u32 %v42, 2146121005
    %v47 = vmul.u32 %v43, 2146121005
    %v48 = vmul.u32 %v44, 2146121005
    %v49 = vshrl.u32 %v45, 15
    %v50 = vshrl.u32 %v46, 15
    %v51 = vshrl.u32 %v47, 15
    %v52 = vshrl.u32 %v48, 15
    %v53 = vxor.u32 %v45, %v49
    %v54 = vxor.u32 %v46, %v50
    %v55 = vxor.u32 %v47, %v51
    %v56 = vxor.u32 %v48, %v52
    %v57 = vmul.u32 %v53, 2221713035
    %v58 = vmul.u32 %v54, 2221713035
    %v59 = vmul.u32 %v55, 2221713035
    %v60 = vmul.u32 %v56, 2221713035
    %v61 = vshrl.u32 %v57, 16
    %v62 = vshrl.u32 %v58, 16
    %v63 = vshrl.u32 %v59, 16
    %v64 = vshrl.u32 %v60, 16
    %v65 = vxor.u32 %v57, %v61
    %v66 = vxor.u32 %v58, %v62
    %v67 = vxor.u32 %v59, %v63
    %v68 = vxor.u32 %v60, %v64
    %v69 = vadd.s32 %v25, 1
    %v70 = vadd.s32 %v26, 1
    %v71 = vadd.s32 %v27, 1
    %v72 = vadd.s32 %v28, 1
    %v73 = vxor.u32 %v69, %v32
    %v74 = vxor.u32 %v70, %v32
    %v75 = vxor.u32 %v71, %v32
    %v76 = vxor.u32 %v72, %v32
    %v77 = vshrl.u32 %v73, 16
    %v78 = vshrl.u32 %v74, 16
    %v79 = vshrl.u32 %v75, 16
    %v80 = vshrl.u32 %v76, 16
    %v81 = vxor.u32 %v73, %v77
    %v82 = vxor.u32 %v74, %v78
    %v83 = vxor.u32 %v75, %v79
    %v84 = vxor.u32 %v76, %v80
    %v85 = vmul.u32 %v81, 2146121005
    %v86 = vmul.u32 %v82, 2146121005
    %v87 = vmul.u32 %v83, 2146121005
    %v88 = vmul.u32 %v84, 2146121005
    %v89 = vshrl.u32 %v85, 15
    %v90 = vshrl.u32 %v86, 15
    %v91 = vshrl.u32 %v87, 15
    %v92 = vshrl.u32 %v88, 15
    %v93 = vxor.u32 %v85, %v89
    %v94 = vxor.u32 %v86, %v90
    %v95 = vxor.u32 %v87, %v91
    %v96 = vxor.u32 %v88, %v92
    %v97 = vmul.u32 %v93, 2221713035
    %v98 = vmul.u32 %v94, 2221713035
    %v99 = vmul.u32 %v95, 2221713035
    %v100 = vmul.u32 %v96, 2221713035
    %v101 = vshrl.u32 %v97, 16
    %v102 = vshrl.u32 %v98, 16
    %v103 = vshrl.u32 %v99, 16
    %v104 = vshrl.u32 %v100, 16
    %v105 = vxor.u32 %v97, %v101
    %v106 = vxor.u32 %v98, %v102
    %v107 = vxor.u32 %v99, %v103
    %v108 = vxor.u32 %v100, %v104
    %v109 = vshrl.u32 %v65, 8
    %v110 = vshrl.u32 %v66, 8
    %v111 = vshrl.u32 %v67, 8
    %v112 = vshrl.u32 %v68, 8
    %v113 = vcvt.s32.f32 %v109
    %v114 = vcvt.s32.f32 %v110
    %v115 = vcvt.s32.f32 %v111
    %v116 = vcvt.s32.f32 %v112
    %v117 = vadd.f32 %v113, 0.5
    %v118 = vadd.f32 %v114, 0.5
    %v119 = vadd.f32 %v115, 0.5
    %v120 = vadd.f32 %v116, 0.5
    %v121 = vshrl.u32 %v105, 8
    %v122 = vshrl.u32 %v106, 8
    %v123 = vshrl.u32 %v107, 8
    %v124 = vshrl.u32 %v108, 8
    %v125 = vcvt.s32.f32 %v121
    %v126 = vcvt.s32.f32 %v122
    %v127 = vcvt.s32.f32 %v123
    %v128 = vcvt.s32.f32 %v124
    %v129 = vadd.f32 %v125, 0.5
    %v130 = vadd.f32 %v126, 0.5
    %v131 = vadd.f32 %v127, 0.5
    %v132 = vadd.f32 %v128, 0.5
    %v133 = vmul.f32 %v117, 5.9604645e-08
    %v134 = vmul.f32 %v118, 5.9604645e-08
    %v135 = vmul.f32 %v119, 5.9604645e-08
    %v136 = vmul.f32 %v120, 5.9604645e-08
    %v137 = vmul.f32 %v129, 3.7450704e-07
    %v138 = vmul.f32 %v130, 3.7450704e-07
    %v139 = vmul.f32 %v131, 3.7450704e-07
    %v140 = vmul.f32 %v132, 3.7450704e-07
    %v141 = vlog2.pop %v133
    %v142 = vmul.f32 %v141, 0.6931472
    %v143 = vlog2.pop %v134
    %v144 = vmul.f32 %v143, 0.6931472
    %v145 = vlog2.pop %v135
    %v146 = vmul.f32 %v145, 0.6931472
    %v147 = vlog2.pop %v136
    %v148 = vmul.f32 %v147, 0.6931472
    %v149 = vmul.f32 %v142, -2.0
    %v150 = vmul.f32 %v144, -2.0
    %v151 = vmul.f32 %v146, -2.0
    %v152 = vmul.f32 %v148, -2.0
    %v153 = vrsqrt.pop %v149
    %v154 = vmul.f32 %v149, %v153
    %vm155 = vcmp.eq.f32.partialorder %v149, inf
    %v156 = vsel %vm155, %v149, %v154
    %vm157 = vcmp.eq.f32.partialorder %v149, 0.0
    %v158 = vand.u32 %v149, 2147483648
    %v159 = vsel %vm157, %v158, %v156
    %v160 = vrsqrt.pop %v150
    %v161 = vmul.f32 %v150, %v160
    %vm162 = vcmp.eq.f32.partialorder %v150, inf
    %v163 = vsel %vm162, %v150, %v161
    %vm164 = vcmp.eq.f32.partialorder %v150, 0.0
    %v165 = vand.u32 %v150, 2147483648
    %v166 = vsel %vm164, %v165, %v163
    %v167 = vrsqrt.pop %v151
    %v168 = vmul.f32 %v151, %v167
    %vm169 = vcmp.eq.f32.partialorder %v151, inf
    %v170 = vsel %vm169, %v151, %v168
    %vm171 = vcmp.eq.f32.partialorder %v151, 0.0
    %v172 = vand.u32 %v151, 2147483648
    %v173 = vsel %vm171, %v172, %v170
    %v174 = vrsqrt.pop %v152
    %v175 = vmul.f32 %v152, %v174
    %vm176 = vcmp.eq.f32.partialorder %v152, inf
    %v177 = vsel %vm176, %v152, %v175
    %vm178 = vcmp.eq.f32.partialorder %v152, 0.0
    %v179 = vand.u32 %v152, 2147483648
    %v180 = vsel %vm178, %v179, %v177
    %v181 = vand.u32 2147483647, %v137
    %vm182 = vcmp.le.f32.partialorder %v181, 0.7853982
    %vm183 = vcmp.lt.s32.totalorder %v137, 0
    %v184 = vand.u32 %v137, 2139095040
    %v185 = vshrl.u32 %v184, 23
    %v186 = vsub.s32 %v185, 127
    %v187 = vand.u32 2147483647, %v137
    %v188 = vand.u32 %v187, 8388607
    %v189 = vor.u32 %v188, 8388608
    %v190 = vsub.s32 0, %v189
    %v191 = vadd.s32 %v186, 1
    %vm192 = vcmp.gt.s32.totalorder %v191, 0
    %v193 = vsel %vm192, %v191, 0
    %v194 = vshrl.u32 %v193, 5
    %v195 = vand.u32 %v193, 31
    %v196 = vsub.s32 32, %v195
    %v197 = vshrl.u32 683565275, %v196
    %v198 = vshll.u32 683565275, %v195
    %v199 = vshrl.u32 2475754826, %v196
    %v200 = vor.u32 %v198, %v199
    %v201 = vshll.u32 2475754826, %v195
    %v202 = vshrl.u32 2131351028, %v196
    %v203 = vor.u32 %v201, %v202
    %v204 = vshll.u32 2131351028, %v195
    %v205 = vshrl.u32 2102212464, %v196
    %v206 = vor.u32 %v204, %v205
    %v207 = vshll.u32 2102212464, %v195
    %v208 = vshrl.u32 920167782, %v196
    %v209 = vor.u32 %v207, %v208
    %v210 = vshll.u32 920167782, %v195
    %v211 = vshrl.u32 1326507024, %v196
    %v212 = vor.u32 %v210, %v211
    %vm213 = vcmp.lt.s32.totalorder %v194, 1
    %vm214 = vcmp.lt.s32.totalorder %v194, 2
    %vm215 = vcmp.lt.s32.totalorder %v194, 3
    %vm216 = vcmp.lt.s32.totalorder %v194, 4
    %v217 = vsel %vm213, %v197, %v200
    %v218 = vsel %vm216, %v206, 2102212464
    %v219 = vsel %vm215, %v203, %v218
    %v220 = vsel %vm214, %v217, %v219
    %v221 = vsel %vm213, %v200, %v203
    %v222 = vsel %vm216, %v209, 920167782
    %v223 = vsel %vm215, %v206, %v222
    %v224 = vsel %vm214, %v221, %v223
    %v225 = vsel %vm213, %v203, %v206
    %v226 = vsel %vm216, %v212, 1326507024
    %v227 = vsel %vm215, %v209, %v226
    %v228 = vsel %vm214, %v225, %v227
    %v229 = vshll.u32 %v189, 8
    %v230 = vmul.u32.u64.compose %v229, %v228
    %v231 = vextract.low.u32 %v230
    %v232 = vextract.high.u32 %v230
    %v233 = vmul.u32.u64.compose %v229, %v224
    %v234 = vextract.low.u32 %v233
    %v235 = vextract.high.u32 %v233
    %v236 = vmul.u32 %v229, %v220
    %v237 = vadd.s32 %v232, %v234
    %vm238 = vc.u32 %v232, %v234
    %v239 = vadd.s32 %v235, 1
    %v240 = vsel %vm238, %v239, %v235
    %v241 = vadd.s32 %v236, %v240
    %v242 = vadd.s32 %v241, 536870912
    %v243 = vshrl.u32 %v242, 30
    %v244 = vshll.u32 %v243, 30
    %v245 = vsub.s32 %v241, %v244
    %vm246 = vcmp.lt.s32.totalorder %v245, 0
    %v247 = vsub.s32 0, %v245
    %v248 = vsel %vm246, %v247, %v245
    %v249 = vclz %v248
    %v250 = vsub.s32 %v249, 2
    %vm251 = vcmp.gt.s32.totalorder 0, %v250
    %v252 = vsel %vm251, 0, %v250
    %v253 = vsub.s32 32, %v252
    %v254 = vshll.u32 %v245, %v252
    %v255 = vshrl.u32 %v237, %v253
    %v256 = vor.u32 %v254, %v255
    %v257 = vsub.s32 4294967266, %v252
    %v258 = vadd.s32 %v257, 127
    %v259 = vshll.u32 %v258, 23
    %v260 = vor.u32 4788187, %v259
    %v261 = vand.u32 2147483647, %v260
    %v263 = vcvt.s32.f32 %v256
    %v264 = vmul.f32 %v263, %v261
    %v265 = vxor.u32 %v264, 2147483648
    %v266 = vsel %vm183, %v265, %v264
    %v267 = vsub.s32 4, %v243
    %v268 = vsel %vm183, %v267, %v243
    %v269 = vsel %vm182, %v137, %v266
    %v270 = vsel %vm182, 0, %v268
    %v271 = vcosq.f32.pop %v269
    %v272 = vsinq.f32.pop %v269
    %vm273 = vweird.f32 %v137
    %v274 = vand.u32 %v270, 3
    %vm275 = vcmp.lt.s32.totalorder %v274, 2
    %vm276 = vcmp.eq.s32.totalorder %v274, 0
    %v277 = vxor.u32 %v272, 2147483648
    %v278 = vsel %vm276, %v271, %v277
    %vm279 = vcmp.eq.s32.totalorder %v274, 2
    %v280 = vxor.u32 %v271, 2147483648
    %v281 = vsel %vm279, %v280, %v272
    %v282 = vsel %vm275, %v278, %v281
    %v283 = vsel %vm273, nan, %v282
    %v284 = vand.u32 2147483647, %v138
    %vm285 = vcmp.le.f32.partialorder %v284, 0.7853982
    %vm286 = vcmp.lt.s32.totalorder %v138, 0
    %v287 = vand.u32 %v138, 2139095040
    %v288 = vshrl.u32 %v287, 23
    %v289 = vsub.s32 %v288, 127
    %v290 = vand.u32 2147483647, %v138
    %v291 = vand.u32 %v290, 8388607
    %v292 = vor.u32 %v291, 8388608
    %v293 = vsub.s32 0, %v292
    %v294 = vadd.s32 %v289, 1
    %vm295 = vcmp.gt.s32.totalorder %v294, 0
    %v296 = vsel %vm295, %v294, 0
    %v297 = vshrl.u32 %v296, 5
    %v298 = vand.u32 %v296, 31
    %v299 = vsub.s32 32, %v298
    %v300 = vshrl.u32 683565275, %v299
    %v301 = vshll.u32 683565275, %v298
    %v302 = vshrl.u32 2475754826, %v299
    %v303 = vor.u32 %v301, %v302
    %v304 = vshll.u32 2475754826, %v298
    %v305 = vshrl.u32 2131351028, %v299
    %v306 = vor.u32 %v304, %v305
    %v307 = vshll.u32 2131351028, %v298
    %v308 = vshrl.u32 2102212464, %v299
    %v309 = vor.u32 %v307, %v308
    %v310 = vshll.u32 2102212464, %v298
    %v311 = vshrl.u32 920167782, %v299
    %v312 = vor.u32 %v310, %v311
    %v313 = vshll.u32 920167782, %v298
    %v314 = vshrl.u32 1326507024, %v299
    %v315 = vor.u32 %v313, %v314
    %vm316 = vcmp.lt.s32.totalorder %v297, 1
    %vm317 = vcmp.lt.s32.totalorder %v297, 2
    %vm318 = vcmp.lt.s32.totalorder %v297, 3
    %vm319 = vcmp.lt.s32.totalorder %v297, 4
    %v320 = vsel %vm316, %v300, %v303
    %v321 = vsel %vm319, %v309, 2102212464
    %v322 = vsel %vm318, %v306, %v321
    %v323 = vsel %vm317, %v320, %v322
    %v324 = vsel %vm316, %v303, %v306
    %v325 = vsel %vm319, %v312, 920167782
    %v326 = vsel %vm318, %v309, %v325
    %v327 = vsel %vm317, %v324, %v326
    %v328 = vsel %vm316, %v306, %v309
    %v329 = vsel %vm319, %v315, 1326507024
    %v330 = vsel %vm318, %v312, %v329
    %v331 = vsel %vm317, %v328, %v330
    %v332 = vshll.u32 %v292, 8
    %v333 = vmul.u32.u64.compose %v332, %v331
    %v334 = vextract.low.u32 %v333
    %v335 = vextract.high.u32 %v333
    %v336 = vmul.u32.u64.compose %v332, %v327
    %v337 = vextract.low.u32 %v336
    %v338 = vextract.high.u32 %v336
    %v339 = vmul.u32 %v332, %v323
    %v340 = vadd.s32 %v335, %v337
    %vm341 = vc.u32 %v335, %v337
    %v342 = vadd.s32 %v338, 1
    %v343 = vsel %vm341, %v342, %v338
    %v344 = vadd.s32 %v339, %v343
    %v345 = vadd.s32 %v344, 536870912
    %v346 = vshrl.u32 %v345, 30
    %v347 = vshll.u32 %v346, 30
    %v348 = vsub.s32 %v344, %v347
    %vm349 = vcmp.lt.s32.totalorder %v348, 0
    %v350 = vsub.s32 0, %v348
    %v351 = vsel %vm349, %v350, %v348
    %v352 = vclz %v351
    %v353 = vsub.s32 %v352, 2
    %vm354 = vcmp.gt.s32.totalorder 0, %v353
    %v355 = vsel %vm354, 0, %v353
    %v356 = vsub.s32 32, %v355
    %v357 = vshll.u32 %v348, %v355
    %v358 = vshrl.u32 %v340, %v356
    %v359 = vor.u32 %v357, %v358
    %v360 = vsub.s32 4294967266, %v355
    %v361 = vadd.s32 %v360, 127
    %v362 = vshll.u32 %v361, 23
    %v363 = vor.u32 4788187, %v362
    %v364 = vand.u32 2147483647, %v363
    %v366 = vcvt.s32.f32 %v359
    %v367 = vmul.f32 %v366, %v364
    %v368 = vxor.u32 %v367, 2147483648
    %v369 = vsel %vm286, %v368, %v367
    %v370 = vsub.s32 4, %v346
    %v371 = vsel %vm286, %v370, %v346
    %v372 = vsel %vm285, %v138, %v369
    %v373 = vsel %vm285, 0, %v371
    %v374 = vcosq.f32.pop %v372
    %v375 = vsinq.f32.pop %v372
    %vm376 = vweird.f32 %v138
    %v377 = vand.u32 %v373, 3
    %vm378 = vcmp.lt.s32.totalorder %v377, 2
    %vm379 = vcmp.eq.s32.totalorder %v377, 0
    %v380 = vxor.u32 %v375, 2147483648
    %v381 = vsel %vm379, %v374, %v380
    %vm382 = vcmp.eq.s32.totalorder %v377, 2
    %v383 = vxor.u32 %v374, 2147483648
    %v384 = vsel %vm382, %v383, %v375
    %v385 = vsel %vm378, %v381, %v384
    %v386 = vsel %vm376, nan, %v385
    %v387 = vand.u32 2147483647, %v139
    %vm388 = vcmp.le.f32.partialorder %v387, 0.7853982
    %vm389 = vcmp.lt.s32.totalorder %v139, 0
    %v390 = vand.u32 %v139, 2139095040
    %v391 = vshrl.u32 %v390, 23
    %v392 = vsub.s32 %v391, 127
    %v393 = vand.u32 2147483647, %v139
    %v394 = vand.u32 %v393, 8388607
    %v395 = vor.u32 %v394, 8388608
    %v396 = vsub.s32 0, %v395
    %v397 = vadd.s32 %v392, 1
    %vm398 = vcmp.gt.s32.totalorder %v397, 0
    %v399 = vsel %vm398, %v397, 0
    %v400 = vshrl.u32 %v399, 5
    %v401 = vand.u32 %v399, 31
    %v402 = vsub.s32 32, %v401
    %v403 = vshrl.u32 683565275, %v402
    %v404 = vshll.u32 683565275, %v401
    %v405 = vshrl.u32 2475754826, %v402
    %v406 = vor.u32 %v404, %v405
    %v407 = vshll.u32 2475754826, %v401
    %v408 = vshrl.u32 2131351028, %v402
    %v409 = vor.u32 %v407, %v408
    %v410 = vshll.u32 2131351028, %v401
    %v411 = vshrl.u32 2102212464, %v402
    %v412 = vor.u32 %v410, %v411
    %v413 = vshll.u32 2102212464, %v401
    %v414 = vshrl.u32 920167782, %v402
    %v415 = vor.u32 %v413, %v414
    %v416 = vshll.u32 920167782, %v401
    %v417 = vshrl.u32 1326507024, %v402
    %v418 = vor.u32 %v416, %v417
    %vm419 = vcmp.lt.s32.totalorder %v400, 1
    %vm420 = vcmp.lt.s32.totalorder %v400, 2
    %vm421 = vcmp.lt.s32.totalorder %v400, 3
    %vm422 = vcmp.lt.s32.totalorder %v400, 4
    %v423 = vsel %vm419, %v403, %v406
    %v424 = vsel %vm422, %v412, 2102212464
    %v425 = vsel %vm421, %v409, %v424
    %v426 = vsel %vm420, %v423, %v425
    %v427 = vsel %vm419, %v406, %v409
    %v428 = vsel %vm422, %v415, 920167782
    %v429 = vsel %vm421, %v412, %v428
    %v430 = vsel %vm420, %v427, %v429
    %v431 = vsel %vm419, %v409, %v412
    %v432 = vsel %vm422, %v418, 1326507024
    %v433 = vsel %vm421, %v415, %v432
    %v434 = vsel %vm420, %v431, %v433
    %v435 = vshll.u32 %v395, 8
    %v436 = vmul.u32.u64.compose %v435, %v434
    %v437 = vextract.low.u32 %v436
    %v438 = vextract.high.u32 %v436
    %v439 = vmul.u32.u64.compose %v435, %v430
    %v440 = vextract.low.u32 %v439
    %v441 = vextract.high.u32 %v439
    %v442 = vmul.u32 %v435, %v426
    %v443 = vadd.s32 %v438, %v440
    %vm444 = vc.u32 %v438, %v440
    %v445 = vadd.s32 %v441, 1
    %v446 = vsel %vm444, %v445, %v441
    %v447 = vadd.s32 %v442, %v446
    %v448 = vadd.s32 %v447, 536870912
    %v449 = vshrl.u32 %v448, 30
    %v450 = vshll.u32 %v449, 30
    %v451 = vsub.s32 %v447, %v450
    %vm452 = vcmp.lt.s32.totalorder %v451, 0
    %v453 = vsub.s32 0, %v451
    %v454 = vsel %vm452, %v453, %v451
    %v455 = vclz %v454
    %v456 = vsub.s32 %v455, 2
    %vm457 = vcmp.gt.s32.totalorder 0, %v456
    %v458 = vsel %vm457, 0, %v456
    %v459 = vsub.s32 32, %v458
    %v460 = vshll.u32 %v451, %v458
    %v461 = vshrl.u32 %v443, %v459
    %v462 = vor.u32 %v460, %v461
    %v463 = vsub.s32 4294967266, %v458
    %v464 = vadd.s32 %v463, 127
    %v465 = vshll.u32 %v464, 23
    %v466 = vor.u32 4788187, %v465
    %v467 = vand.u32 2147483647, %v466
    %v469 = vcvt.s32.f32 %v462
    %v470 = vmul.f32 %v469, %v467
    %v471 = vxor.u32 %v470, 2147483648
    %v472 = vsel %vm389, %v471, %v470
    %v473 = vsub.s32 4, %v449
    %v474 = vsel %vm389, %v473, %v449
    %v475 = vsel %vm388, %v139, %v472
    %v476 = vsel %vm388, 0, %v474
    %v477 = vcosq.f32.pop %v475
    %v478 = vsinq.f32.pop %v475
    %vm479 = vweird.f32 %v139
    %v480 = vand.u32 %v476, 3
    %vm481 = vcmp.lt.s32.totalorder %v480, 2
    %vm482 = vcmp.eq.s32.totalorder %v480, 0
    %v483 = vxor.u32 %v478, 2147483648
    %v484 = vsel %vm482, %v477, %v483
    %vm485 = vcmp.eq.s32.totalorder %v480, 2
    %v486 = vxor.u32 %v477, 2147483648
    %v487 = vsel %vm485, %v486, %v478
    %v488 = vsel %vm481, %v484, %v487
    %v489 = vsel %vm479, nan, %v488
    %v490 = vand.u32 2147483647, %v140
    %vm491 = vcmp.le.f32.partialorder %v490, 0.7853982
    %vm492 = vcmp.lt.s32.totalorder %v140, 0
    %v493 = vand.u32 %v140, 2139095040
    %v494 = vshrl.u32 %v493, 23
    %v495 = vsub.s32 %v494, 127
    %v496 = vand.u32 2147483647, %v140
    %v497 = vand.u32 %v496, 8388607
    %v498 = vor.u32 %v497, 8388608
    %v499 = vsub.s32 0, %v498
    %v500 = vadd.s32 %v495, 1
    %vm501 = vcmp.gt.s32.totalorder %v500, 0
    %v502 = vsel %vm501, %v500, 0
    %v503 = vshrl.u32 %v502, 5
    %v504 = vand.u32 %v502, 31
    %v505 = vsub.s32 32, %v504
    %v506 = vshrl.u32 683565275, %v505
    %v507 = vshll.u32 683565275, %v504
    %v508 = vshrl.u32 2475754826, %v505
    %v509 = vor.u32 %v507, %v508
    %v510 = vshll.u32 2475754826, %v504
    %v511 = vshrl.u32 2131351028, %v505
    %v512 = vor.u32 %v510, %v511
    %v513 = vshll.u32 2131351028, %v504
    %v514 = vshrl.u32 2102212464, %v505
    %v515 = vor.u32 %v513, %v514
    %v516 = vshll.u32 2102212464, %v504
    %v517 = vshrl.u32 920167782, %v505
    %v518 = vor.u32 %v516, %v517
    %v519 = vshll.u32 920167782, %v504
    %v520 = vshrl.u32 1326507024, %v505
    %v521 = vor.u32 %v519, %v520
    %vm522 = vcmp.lt.s32.totalorder %v503, 1
    %vm523 = vcmp.lt.s32.totalorder %v503, 2
    %vm524 = vcmp.lt.s32.totalorder %v503, 3
    %vm525 = vcmp.lt.s32.totalorder %v503, 4
    %v526 = vsel %vm522, %v506, %v509
    %v527 = vsel %vm525, %v515, 2102212464
    %v528 = vsel %vm524, %v512, %v527
    %v529 = vsel %vm523, %v526, %v528
    %v530 = vsel %vm522, %v509, %v512
    %v531 = vsel %vm525, %v518, 920167782
    %v532 = vsel %vm524, %v515, %v531
    %v533 = vsel %vm523, %v530, %v532
    %v534 = vsel %vm522, %v512, %v515
    %v535 = vsel %vm525, %v521, 1326507024
    %v536 = vsel %vm524, %v518, %v535
    %v537 = vsel %vm523, %v534, %v536
    %v538 = vshll.u32 %v498, 8
    %v539 = vmul.u32.u64.compose %v538, %v537
    %v540 = vextract.low.u32 %v539
    %v541 = vextract.high.u32 %v539
    %v542 = vmul.u32.u64.compose %v538, %v533
    %v543 = vextract.low.u32 %v542
    %v544 = vextract.high.u32 %v542
    %v545 = vmul.u32 %v538, %v529
    %v546 = vadd.s32 %v541, %v543
    %vm547 = vc.u32 %v541, %v543
    %v548 = vadd.s32 %v544, 1
    %v549 = vsel %vm547, %v548, %v544
    %v550 = vadd.s32 %v545, %v549
    %v551 = vadd.s32 %v550, 536870912
    %v552 = vshrl.u32 %v551, 30
    %v553 = vshll.u32 %v552, 30
    %v554 = vsub.s32 %v550, %v553
    %vm555 = vcmp.lt.s32.totalorder %v554, 0
    %v556 = vsub.s32 0, %v554
    %v557 = vsel %vm555, %v556, %v554
    %v558 = vclz %v557
    %v559 = vsub.s32 %v558, 2
    %vm560 = vcmp.gt.s32.totalorder 0, %v559
    %v561 = vsel %vm560, 0, %v559
    %v562 = vsub.s32 32, %v561
    %v563 = vshll.u32 %v554, %v561
    %v564 = vshrl.u32 %v546, %v562
    %v565 = vor.u32 %v563, %v564
    %v566 = vsub.s32 4294967266, %v561
    %v567 = vadd.s32 %v566, 127
    %v568 = vshll.u32 %v567, 23
    %v569 = vor.u32 4788187, %v568
    %v570 = vand.u32 2147483647, %v569
    %v572 = vcvt.s32.f32 %v565
    %v573 = vmul.f32 %v572, %v570
    %v574 = vxor.u32 %v573, 2147483648
    %v575 = vsel %vm492, %v574, %v573
    %v576 = vsub.s32 4, %v552
    %v577 = vsel %vm492, %v576, %v552
    %v578 = vsel %vm491, %v140, %v575
    %v579 = vsel %vm491, 0, %v577
    %v580 = vcosq.f32.pop %v578
    %v581 = vsinq.f32.pop %v578
    %vm582 = vweird.f32 %v140
    %v583 = vand.u32 %v579, 3
    %vm584 = vcmp.lt.s32.totalorder %v583, 2
    %vm585 = vcmp.eq.s32.totalorder %v583, 0
    %v586 = vxor.u32 %v581, 2147483648
    %v587 = vsel %vm585, %v580, %v586
    %vm588 = vcmp.eq.s32.totalorder %v583, 2
    %v589 = vxor.u32 %v580, 2147483648
    %v590 = vsel %vm588, %v589, %v581
    %v591 = vsel %vm584, %v587, %v590
    %v592 = vsel %vm582, nan, %v591
    %v593 = vmul.f32 %v159, %v283
    %v594 = vmul.f32 %v166, %v386
    %v595 = vmul.f32 %v173, %v489
    %v596 = vmul.f32 %v180, %v592
    %v597 = vand.u32 2147483647, %v137
    %vm598 = vcmp.le.f32.partialorder %v597, 0.7853982
    %vm599 = vcmp.lt.s32.totalorder %v137, 0
    %v600 = vand.u32 %v137, 2139095040
    %v601 = vshrl.u32 %v600, 23
    %v602 = vsub.s32 %v601, 127
    %v603 = vand.u32 2147483647, %v137
    %v604 = vand.u32 %v603, 8388607
    %v605 = vor.u32 %v604, 8388608
    %v606 = vsub.s32 0, %v605
    %v607 = vadd.s32 %v602, 1
    %vm608 = vcmp.gt.s32.totalorder %v607, 0
    %v609 = vsel %vm608, %v607, 0
    %v610 = vshrl.u32 %v609, 5
    %v611 = vand.u32 %v609, 31
    %v612 = vsub.s32 32, %v611
    %v613 = vshrl.u32 683565275, %v612
    %v614 = vshll.u32 683565275, %v611
    %v615 = vshrl.u32 2475754826, %v612
    %v616 = vor.u32 %v614, %v615
    %v617 = vshll.u32 2475754826, %v611
    %v618 = vshrl.u32 2131351028, %v612
    %v619 = vor.u32 %v617, %v618
    %v620 = vshll.u32 2131351028, %v611
    %v621 = vshrl.u32 2102212464, %v612
    %v622 = vor.u32 %v620, %v621
    %v623 = vshll.u32 2102212464, %v611
    %v624 = vshrl.u32 920167782, %v612
    %v625 = vor.u32 %v623, %v624
    %v626 = vshll.u32 920167782, %v611
    %v627 = vshrl.u32 1326507024, %v612
    %v628 = vor.u32 %v626, %v627
    %vm629 = vcmp.lt.s32.totalorder %v610, 1
    %vm630 = vcmp.lt.s32.totalorder %v610, 2
    %vm631 = vcmp.lt.s32.totalorder %v610, 3
    %vm632 = vcmp.lt.s32.totalorder %v610, 4
    %v633 = vsel %vm629, %v613, %v616
    %v634 = vsel %vm632, %v622, 2102212464
    %v635 = vsel %vm631, %v619, %v634
    %v636 = vsel %vm630, %v633, %v635
    %v637 = vsel %vm629, %v616, %v619
    %v638 = vsel %vm632, %v625, 920167782
    %v639 = vsel %vm631, %v622, %v638
    %v640 = vsel %vm630, %v637, %v639
    %v641 = vsel %vm629, %v619, %v622
    %v642 = vsel %vm632, %v628, 1326507024
    %v643 = vsel %vm631, %v625, %v642
    %v644 = vsel %vm630, %v641, %v643
    %v645 = vshll.u32 %v605, 8
    %v646 = vmul.u32.u64.compose %v645, %v644
    %v647 = vextract.low.u32 %v646
    %v648 = vextract.high.u32 %v646
    %v649 = vmul.u32.u64.compose %v645, %v640
    %v650 = vextract.low.u32 %v649
    %v651 = vextract.high.u32 %v649
    %v652 = vmul.u32 %v645, %v636
    %v653 = vadd.s32 %v648, %v650
    %vm654 = vc.u32 %v648, %v650
    %v655 = vadd.s32 %v651, 1
    %v656 = vsel %vm654, %v655, %v651
    %v657 = vadd.s32 %v652, %v656
    %v658 = vadd.s32 %v657, 536870912
    %v659 = vshrl.u32 %v658, 30
    %v660 = vshll.u32 %v659, 30
    %v661 = vsub.s32 %v657, %v660
    %vm662 = vcmp.lt.s32.totalorder %v661, 0
    %v663 = vsub.s32 0, %v661
    %v664 = vsel %vm662, %v663, %v661
    %v665 = vclz %v664
    %v666 = vsub.s32 %v665, 2
    %vm667 = vcmp.gt.s32.totalorder 0, %v666
    %v668 = vsel %vm667, 0, %v666
    %v669 = vsub.s32 32, %v668
    %v670 = vshll.u32 %v661, %v668
    %v671 = vshrl.u32 %v653, %v669
    %v672 = vor.u32 %v670, %v671
    %v673 = vsub.s32 4294967266, %v668
    %v674 = vadd.s32 %v673, 127
    %v675 = vshll.u32 %v674, 23
    %v676 = vor.u32 4788187, %v675
    %v677 = vand.u32 2147483647, %v676
    %v679 = vcvt.s32.f32 %v672
    %v680 = vmul.f32 %v679, %v677
    %v681 = vxor.u32 %v680, 2147483648
    %v682 = vsel %vm599, %v681, %v680
    %v683 = vsub.s32 4, %v659
    %v684 = vsel %vm599, %v683, %v659
    %v685 = vsel %vm598, %v137, %v682
    %v686 = vsel %vm598, 0, %v684
    %v687 = vcosq.f32.pop %v685
    %v688 = vsinq.f32.pop %v685
    %vm689 = vweird.f32 %v137
    %v690 = vadd.s32 %v686, 3
    %v691 = vand.u32 %v690, 3
    %vm692 = vcmp.lt.s32.totalorder %v691, 2
    %vm693 = vcmp.eq.s32.totalorder %v691, 0
    %v694 = vxor.u32 %v688, 2147483648
    %v695 = vsel %vm693, %v687, %v694
    %vm696 = vcmp.eq.s32.totalorder %v691, 2
    %v697 = vxor.u32 %v687, 2147483648
    %v698 = vsel %vm696, %v697, %v688
    %v699 = vsel %vm692, %v695, %v698
    %v700 = vsel %vm689, nan, %v699
    %v701 = vand.u32 2147483647, %v138
    %vm702 = vcmp.le.f32.partialorder %v701, 0.7853982
    %vm703 = vcmp.lt.s32.totalorder %v138, 0
    %v704 = vand.u32 %v138, 2139095040
    %v705 = vshrl.u32 %v704, 23
    %v706 = vsub.s32 %v705, 127
    %v707 = vand.u32 2147483647, %v138
    %v708 = vand.u32 %v707, 8388607
    %v709 = vor.u32 %v708, 8388608
    %v710 = vsub.s32 0, %v709
    %v711 = vadd.s32 %v706, 1
    %vm712 = vcmp.gt.s32.totalorder %v711, 0
    %v713 = vsel %vm712, %v711, 0
    %v714 = vshrl.u32 %v713, 5
    %v715 = vand.u32 %v713, 31
    %v716 = vsub.s32 32, %v715
    %v717 = vshrl.u32 683565275, %v716
    %v718 = vshll.u32 683565275, %v715
    %v719 = vshrl.u32 2475754826, %v716
    %v720 = vor.u32 %v718, %v719
    %v721 = vshll.u32 2475754826, %v715
    %v722 = vshrl.u32 2131351028, %v716
    %v723 = vor.u32 %v721, %v722
    %v724 = vshll.u32 2131351028, %v715
    %v725 = vshrl.u32 2102212464, %v716
    %v726 = vor.u32 %v724, %v725
    %v727 = vshll.u32 2102212464, %v715
    %v728 = vshrl.u32 920167782, %v716
    %v729 = vor.u32 %v727, %v728
    %v730 = vshll.u32 920167782, %v715
    %v731 = vshrl.u32 1326507024, %v716
    %v732 = vor.u32 %v730, %v731
    %vm733 = vcmp.lt.s32.totalorder %v714, 1
    %vm734 = vcmp.lt.s32.totalorder %v714, 2
    %vm735 = vcmp.lt.s32.totalorder %v714, 3
    %vm736 = vcmp.lt.s32.totalorder %v714, 4
    %v737 = vsel %vm733, %v717, %v720
    %v738 = vsel %vm736, %v726, 2102212464
    %v739 = vsel %vm735, %v723, %v738
    %v740 = vsel %vm734, %v737, %v739
    %v741 = vsel %vm733, %v720, %v723
    %v742 = vsel %vm736, %v729, 920167782
    %v743 = vsel %vm735, %v726, %v742
    %v744 = vsel %vm734, %v741, %v743
    %v745 = vsel %vm733, %v723, %v726
    %v746 = vsel %vm736, %v732, 1326507024
    %v747 = vsel %vm735, %v729, %v746
    %v748 = vsel %vm734, %v745, %v747
    %v749 = vshll.u32 %v709, 8
    %v750 = vmul.u32.u64.compose %v749, %v748
    %v751 = vextract.low.u32 %v750
    %v752 = vextract.high.u32 %v750
    %v753 = vmul.u32.u64.compose %v749, %v744
    %v754 = vextract.low.u32 %v753
    %v755 = vextract.high.u32 %v753
    %v756 = vmul.u32 %v749, %v740
    %v757 = vadd.s32 %v752, %v754
    %vm758 = vc.u32 %v752, %v754
    %v759 = vadd.s32 %v755, 1
    %v760 = vsel %vm758, %v759, %v755
    %v761 = vadd.s32 %v756, %v760
    %v762 = vadd.s32 %v761, 536870912
    %v763 = vshrl.u32 %v762, 30
    %v764 = vshll.u32 %v763, 30
    %v765 = vsub.s32 %v761, %v764
    %vm766 = vcmp.lt.s32.totalorder %v765, 0
    %v767 = vsub.s32 0, %v765
    %v768 = vsel %vm766, %v767, %v765
    %v769 = vclz %v768
    %v770 = vsub.s32 %v769, 2
    %vm771 = vcmp.gt.s32.totalorder 0, %v770
    %v772 = vsel %vm771, 0, %v770
    %v773 = vsub.s32 32, %v772
    %v774 = vshll.u32 %v765, %v772
    %v775 = vshrl.u32 %v757, %v773
    %v776 = vor.u32 %v774, %v775
    %v777 = vsub.s32 4294967266, %v772
    %v778 = vadd.s32 %v777, 127
    %v779 = vshll.u32 %v778, 23
    %v780 = vor.u32 4788187, %v779
    %v781 = vand.u32 2147483647, %v780
    %v783 = vcvt.s32.f32 %v776
    %v784 = vmul.f32 %v783, %v781
    %v785 = vxor.u32 %v784, 2147483648
    %v786 = vsel %vm703, %v785, %v784
    %v787 = vsub.s32 4, %v763
    %v788 = vsel %vm703, %v787, %v763
    %v789 = vsel %vm702, %v138, %v786
    %v790 = vsel %vm702, 0, %v788
    %v791 = vcosq.f32.pop %v789
    %v792 = vsinq.f32.pop %v789
    %vm793 = vweird.f32 %v138
    %v794 = vadd.s32 %v790, 3
    %v795 = vand.u32 %v794, 3
    %vm796 = vcmp.lt.s32.totalorder %v795, 2
    %vm797 = vcmp.eq.s32.totalorder %v795, 0
    %v798 = vxor.u32 %v792, 2147483648
    %v799 = vsel %vm797, %v791, %v798
    %vm800 = vcmp.eq.s32.totalorder %v795, 2
    %v801 = vxor.u32 %v791, 2147483648
    %v802 = vsel %vm800, %v801, %v792
    %v803 = vsel %vm796, %v799, %v802
    %v804 = vsel %vm793, nan, %v803
    %v805 = vand.u32 2147483647, %v139
    %vm806 = vcmp.le.f32.partialorder %v805, 0.7853982
    %vm807 = vcmp.lt.s32.totalorder %v139, 0
    %v808 = vand.u32 %v139, 2139095040
    %v809 = vshrl.u32 %v808, 23
    %v810 = vsub.s32 %v809, 127
    %v811 = vand.u32 2147483647, %v139
    %v812 = vand.u32 %v811, 8388607
    %v813 = vor.u32 %v812, 8388608
    %v814 = vsub.s32 0, %v813
    %v815 = vadd.s32 %v810, 1
    %vm816 = vcmp.gt.s32.totalorder %v815, 0
    %v817 = vsel %vm816, %v815, 0
    %v818 = vshrl.u32 %v817, 5
    %v819 = vand.u32 %v817, 31
    %v820 = vsub.s32 32, %v819
    %v821 = vshrl.u32 683565275, %v820
    %v822 = vshll.u32 683565275, %v819
    %v823 = vshrl.u32 2475754826, %v820
    %v824 = vor.u32 %v822, %v823
    %v825 = vshll.u32 2475754826, %v819
    %v826 = vshrl.u32 2131351028, %v820
    %v827 = vor.u32 %v825, %v826
    %v828 = vshll.u32 2131351028, %v819
    %v829 = vshrl.u32 2102212464, %v820
    %v830 = vor.u32 %v828, %v829
    %v831 = vshll.u32 2102212464, %v819
    %v832 = vshrl.u32 920167782, %v820
    %v833 = vor.u32 %v831, %v832
    %v834 = vshll.u32 920167782, %v819
    %v835 = vshrl.u32 1326507024, %v820
    %v836 = vor.u32 %v834, %v835
    %vm837 = vcmp.lt.s32.totalorder %v818, 1
    %vm838 = vcmp.lt.s32.totalorder %v818, 2
    %vm839 = vcmp.lt.s32.totalorder %v818, 3
    %vm840 = vcmp.lt.s32.totalorder %v818, 4
    %v841 = vsel %vm837, %v821, %v824
    %v842 = vsel %vm840, %v830, 2102212464
    %v843 = vsel %vm839, %v827, %v842
    %v844 = vsel %vm838, %v841, %v843
    %v845 = vsel %vm837, %v824, %v827
    %v846 = vsel %vm840, %v833, 920167782
    %v847 = vsel %vm839, %v830, %v846
    %v848 = vsel %vm838, %v845, %v847
    %v849 = vsel %vm837, %v827, %v830
    %v850 = vsel %vm840, %v836, 1326507024
    %v851 = vsel %vm839, %v833, %v850
    %v852 = vsel %vm838, %v849, %v851
    %v853 = vshll.u32 %v813, 8
    %v854 = vmul.u32.u64.compose %v853, %v852
    %v855 = vextract.low.u32 %v854
    %v856 = vextract.high.u32 %v854
    %v857 = vmul.u32.u64.compose %v853, %v848
    %v858 = vextract.low.u32 %v857
    %v859 = vextract.high.u32 %v857
    %v860 = vmul.u32 %v853, %v844
    %v861 = vadd.s32 %v856, %v858
    %vm862 = vc.u32 %v856, %v858
    %v863 = vadd.s32 %v859, 1
    %v864 = vsel %vm862, %v863, %v859
    %v865 = vadd.s32 %v860, %v864
    %v866 = vadd.s32 %v865, 536870912
    %v867 = vshrl.u32 %v866, 30
    %v868 = vshll.u32 %v867, 30
    %v869 = vsub.s32 %v865, %v868
    %vm870 = vcmp.lt.s32.totalorder %v869, 0
    %v871 = vsub.s32 0, %v869
    %v872 = vsel %vm870, %v871, %v869
    %v873 = vclz %v872
    %v874 = vsub.s32 %v873, 2
    %vm875 = vcmp.gt.s32.totalorder 0, %v874
    %v876 = vsel %vm875, 0, %v874
    %v877 = vsub.s32 32, %v876
    %v878 = vshll.u32 %v869, %v876
    %v879 = vshrl.u32 %v861, %v877
    %v880 = vor.u32 %v878, %v879
    %v881 = vsub.s32 4294967266, %v876
    %v882 = vadd.s32 %v881, 127
    %v883 = vshll.u32 %v882, 23
    %v884 = vor.u32 4788187, %v883
    %v885 = vand.u32 2147483647, %v884
    %v887 = vcvt.s32.f32 %v880
    %v888 = vmul.f32 %v887, %v885
    %v889 = vxor.u32 %v888, 2147483648
    %v890 = vsel %vm807, %v889, %v888
    %v891 = vsub.s32 4, %v867
    %v892 = vsel %vm807, %v891, %v867
    %v893 = vsel %vm806, %v139, %v890
    %v894 = vsel %vm806, 0, %v892
    %v895 = vcosq.f32.pop %v893
    %v896 = vsinq.f32.pop %v893
    %vm897 = vweird.f32 %v139
    %v898 = vadd.s32 %v894, 3
    %v899 = vand.u32 %v898, 3
    %vm900 = vcmp.lt.s32.totalorder %v899, 2
    %vm901 = vcmp.eq.s32.totalorder %v899, 0
    %v902 = vxor.u32 %v896, 2147483648
    %v903 = vsel %vm901, %v895, %v902
    %vm904 = vcmp.eq.s32.totalorder %v899, 2
    %v905 = vxor.u32 %v895, 2147483648
    %v906 = vsel %vm904, %v905, %v896
    %v907 = vsel %vm900, %v903, %v906
    %v908 = vsel %vm897, nan, %v907
    %v909 = vand.u32 2147483647, %v140
    %vm910 = vcmp.le.f32.partialorder %v909, 0.7853982
    %vm911 = vcmp.lt.s32.totalorder %v140, 0
    %v912 = vand.u32 %v140, 2139095040
    %v913 = vshrl.u32 %v912, 23
    %v914 = vsub.s32 %v913, 127
    %v915 = vand.u32 2147483647, %v140
    %v916 = vand.u32 %v915, 8388607
    %v917 = vor.u32 %v916, 8388608
    %v918 = vsub.s32 0, %v917
    %v919 = vadd.s32 %v914, 1
    %vm920 = vcmp.gt.s32.totalorder %v919, 0
    %v921 = vsel %vm920, %v919, 0
    %v922 = vshrl.u32 %v921, 5
    %v923 = vand.u32 %v921, 31
    %v924 = vsub.s32 32, %v923
    %v925 = vshrl.u32 683565275, %v924
    %v926 = vshll.u32 683565275, %v923
    %v927 = vshrl.u32 2475754826, %v924
    %v928 = vor.u32 %v926, %v927
    %v929 = vshll.u32 2475754826, %v923
    %v930 = vshrl.u32 2131351028, %v924
    %v931 = vor.u32 %v929, %v930
    %v932 = vshll.u32 2131351028, %v923
    %v933 = vshrl.u32 2102212464, %v924
    %v934 = vor.u32 %v932, %v933
    %v935 = vshll.u32 2102212464, %v923
    %v936 = vshrl.u32 920167782, %v924
    %v937 = vor.u32 %v935, %v936
    %v938 = vshll.u32 920167782, %v923
    %v939 = vshrl.u32 1326507024, %v924
    %v940 = vor.u32 %v938, %v939
    %vm941 = vcmp.lt.s32.totalorder %v922, 1
    %vm942 = vcmp.lt.s32.totalorder %v922, 2
    %vm943 = vcmp.lt.s32.totalorder %v922, 3
    %vm944 = vcmp.lt.s32.totalorder %v922, 4
    %v945 = vsel %vm941, %v925, %v928
    %v946 = vsel %vm944, %v934, 2102212464
    %v947 = vsel %vm943, %v931, %v946
    %v948 = vsel %vm942, %v945, %v947
    %v949 = vsel %vm941, %v928, %v931
    %v950 = vsel %vm944, %v937, 920167782
    %v951 = vsel %vm943, %v934, %v950
    %v952 = vsel %vm942, %v949, %v951
    %v953 = vsel %vm941, %v931, %v934
    %v954 = vsel %vm944, %v940, 1326507024
    %v955 = vsel %vm943, %v937, %v954
    %v956 = vsel %vm942, %v953, %v955
    %v957 = vshll.u32 %v917, 8
    %v958 = vmul.u32.u64.compose %v957, %v956
    %v959 = vextract.low.u32 %v958
    %v960 = vextract.high.u32 %v958
    %v961 = vmul.u32.u64.compose %v957, %v952
    %v962 = vextract.low.u32 %v961
    %v963 = vextract.high.u32 %v961
    %v964 = vmul.u32 %v957, %v948
    %v965 = vadd.s32 %v960, %v962
    %vm966 = vc.u32 %v960, %v962
    %v967 = vadd.s32 %v963, 1
    %v968 = vsel %vm966, %v967, %v963
    %v969 = vadd.s32 %v964, %v968
    %v970 = vadd.s32 %v969, 536870912
    %v971 = vshrl.u32 %v970, 30
    %v972 = vshll.u32 %v971, 30
    %v973 = vsub.s32 %v969, %v972
    %vm974 = vcmp.lt.s32.totalorder %v973, 0
    %v975 = vsub.s32 0, %v973
    %v976 = vsel %vm974, %v975, %v973
    %v977 = vclz %v976
    %v978 = vsub.s32 %v977, 2
    %vm979 = vcmp.gt.s32.totalorder 0, %v978
    %v980 = vsel %vm979, 0, %v978
    %v981 = vsub.s32 32, %v980
    %v982 = vshll.u32 %v973, %v980
    %v983 = vshrl.u32 %v965, %v981
    %v984 = vor.u32 %v982, %v983
    %v985 = vsub.s32 4294967266, %v980
    %v986 = vadd.s32 %v985, 127
    %v987 = vshll.u32 %v986, 23
    %v988 = vor.u32 4788187, %v987
    %v989 = vand.u32 2147483647, %v988
    %v991 = vcvt.s32.f32 %v984
    %v992 = vmul.f32 %v991, %v989
    %v993 = vxor.u32 %v992, 2147483648
    %v994 = vsel %vm911, %v993, %v992
    %v995 = vsub.s32 4, %v971
    %v996 = vsel %vm911, %v995, %v971
    %v997 = vsel %vm910, %v140, %v994
    %v998 = vsel %vm910, 0, %v996
    %v999 = vcosq.f32.pop %v997
    %v1000 = vsinq.f32.pop %v997
    %vm1001 = vweird.f32 %v140
    %v1002 = vadd.s32 %v998, 3
    %v1003 = vand.u32 %v1002, 3
    %vm1004 = vcmp.lt.s32.totalorder %v1003, 2
    %vm1005 = vcmp.eq.s32.totalorder %v1003, 0
    %v1006 = vxor.u32 %v1000, 2147483648
    %v1007 = vsel %vm1005, %v999, %v1006
    %vm1008 = vcmp.eq.s32.totalorder %v1003, 2
    %v1009 = vxor.u32 %v999, 2147483648
    %v1010 = vsel %vm1008, %v1009, %v1000
    %v1011 = vsel %vm1004, %v1007, %v1010
    %v1012 = vsel %vm1001, nan, %v1011
    %v1013 = vmul.f32 %v159, %v700
    %v1014 = vmul.f32 %v166, %v804
    %v1015 = vmul.f32 %v173, %v908
    %v1016 = vmul.f32 %v180, %v1012
    %v1021 = vcombine.low %v593, %v594
    %v1022 = vcombine.low %v595, %v596
    %1025 = vst [vmem:[#allocation3] sm:$0xff] %v1021
    %1026 = vst [vmem:[#allocation3 + $0x8] sm:$0xff] %v1022
    %v1031 = vcombine.low %v1013, %v1014
    %v1032 = vcombine.low %v1015, %v1016
    %1035 = vst [vmem:[#allocation3 + $0x10] sm:$0xff] %v1031
    %1036 = vst [vmem:[#allocation3 + $0x18] sm:$0xff] %v1032
    // Predicated region
    $region6: #{tpu_custom_call.1} parent=1 // pred_check
      _
    $region7: #{tpu_custom_call.1} parent=1 // pred_check_branch
      %1038 = sbr.rel (0) target = $region9
    $region8: #{tpu_custom_call.1} parent=1 // pred_region
      %s1040 = ssub.s32 512, 512
      %1041 = vsyncadd [#allocation4], %s1040
      %s1043 = sshll.u32 [#allocation3], 4
      %s1044 = int_to_ptr.vmem [resolvable:$true] %s1043
      %1046 = dma.vmem_to_hbm [thread:$0]  %s1044, 512, %s1, [#allocation4]
    $region9: #{tpu_custom_call.1} parent=1 // pred_fallthru
      _
    // Predicated region
    $region10: #{tpu_custom_call.1} parent=1 // pred_check
      _
    $region11: #{tpu_custom_call.1} parent=1 // pred_check_branch
      %1048 = sbr.rel (0) target = $region13
    $region12: #{tpu_custom_call.1} parent=1 // pred_region
      %1049 = dma.done [#allocation4], 512
    $region13: #{tpu_custom_call.1} parent=1 // pred_fallthru
      _
    %1050 = vsyncpa [#allocation4], 1

</llo_original>
